<compile_context>
chip_gen: v5e
topology: v5e:2x2
jax: 0.10.0
libtpu: 0.0.40
codegen_flags: <defaults>
</compile_context>

<pallas_src>
import math

import jax
import jax.numpy as jnp
from jax.experimental import pallas as pl
from jax.experimental.pallas import tpu as pltpu


def _make_graph_conv_kernel(batch, node_n, fin, fout, has_bias):
    def kernel(x_ref, w_ref, adj_ref, *rest):
        if has_bias:
            b_ref, o_ref = rest
        else:
            (o_ref,) = rest

        # --- One fused weight matmul for the whole batch -------------------
        # (B, N, Fin) viewed as (B*N, Fin): last dim unchanged -> free view.
        x_flat = x_ref[...].reshape(batch * node_n, fin)
        support = jnp.dot(x_flat, w_ref[...],
                          preferred_element_type=jnp.float32)        # (B*N, Fout)
        support = support.reshape(batch, node_n, fout)                # (B, N, Fout)

        adj = adj_ref[...]                                            # (N, N)

        # Hoisted bias broadcast: done once, reused for every batch element.
        if has_bias:
            bias_nf = jnp.broadcast_to(b_ref[...], (node_n, fout))    # (N, Fout)

        # --- Per-batch neighbour aggregation (B is tiny -> static unroll) --
        # TODO(synk): for large B switch to the flattened form or
        # lax.fori_loop(..., unroll=True) to bound vreg live ranges.
        for b in range(batch):
            agg = jnp.dot(adj, support[b],
                          preferred_element_type=jnp.float32)         # (N, Fout)
            if has_bias:
                agg = agg + bias_nf
            o_ref[b] = agg.astype(o_ref.dtype)

    return kernel


def graph_convolution(x, weight, adj, bias=None):
    """Pallas implementation of GraphConvolution.forward.

    x:      (B, N, Fin)
    weight: (Fin, Fout)
    adj:    (N, N)
    bias:   (Fout,) or None
    returns (B, N, Fout)
    """
    B, N, Fin = x.shape
    Fout = weight.shape[1]
    has_bias = bias is not None

    kernel = _make_graph_conv_kernel(B, N, Fin, Fout, has_bias)

    operands = [x, weight, adj]
    if has_bias:
        # 2-D (1, Fout) row for a clean lane-major VMEM layout.  (In a real
        # module this reshape would be done once at parameter-init time.)
        operands.append(bias.reshape(1, Fout))

    vmem_spec = pl.BlockSpec(memory_space=pltpu.MemorySpace.VMEM)

    return pl.pallas_call(
        kernel,
        out_shape=jax.ShapeDtypeStruct((B, N, Fout), x.dtype),
        in_specs=[vmem_spec] * len(operands),
        out_specs=vmem_spec,
    )(*operands)


if __name__ == "__main__":
    # Module hyper-params (small, consistent with the module defaults).
    batch = 2
    node_n = 57          # default in the PyTorch module (19 joints * 3)
    in_features = 16
    out_features = 32

    key = jax.random.PRNGKey(0)
    k_x, k_w, k_a, k_b = jax.random.split(key, 4)

    # Deterministic init mirroring reset_parameters():
    #   stdv = 1 / sqrt(out_features); uniform(-stdv, stdv) for weight, adj, bias.
    stdv = 1.0 / math.sqrt(out_features)
    weight = jax.random.uniform(k_w, (in_features, out_features),
                                jnp.float32, minval=-stdv, maxval=stdv)
    adj = jax.random.uniform(k_a, (node_n, node_n),
                             jnp.float32, minval=-stdv, maxval=stdv)
    bias = jax.random.uniform(k_b, (out_features,),
                              jnp.float32, minval=-stdv, maxval=stdv)

    x = jax.random.normal(k_x, (batch, node_n, in_features), jnp.float32)

    out = graph_convolution(x, weight, adj, bias)
    out = jax.block_until_ready(out)

    # Pure-JAX reference for correctness (same contraction order as the kernel).
    support_ref = jnp.matmul(x, weight)
    out_ref = jnp.matmul(adj, support_ref) + bias
    assert out.shape == (batch, node_n, out_features)
    assert jnp.allclose(out, out_ref, atol=1e-5, rtol=1e-5)

    # Also exercise the bias=False path once.
    out_nb = jax.block_until_ready(graph_convolution(x, weight, adj, None))
    assert jnp.allclose(out_nb, jnp.matmul(adj, support_ref), atol=1e-5, rtol=1e-5)

    print("KERNEL_OK")
</pallas_src>

<mosaic_0001>
module attributes {stable_mosaic.version = 11 : i64} {
  func.func @kernel(%arg0: memref<2x57x16xf32, #tpu.memory_space<vmem>>, %arg1: memref<16x32xf32, #tpu.memory_space<vmem>>, %arg2: memref<57x57xf32, #tpu.memory_space<vmem>>, %arg3: memref<1x32xf32, #tpu.memory_space<vmem>>, %arg4: memref<2x57x32xf32, #tpu.memory_space<vmem>>) attributes {dimension_semantics = [], scalar_prefetch = 0 : i64, scratch_operands = 0 : i64, tpu.core_type = #tpu.core_type<tc>} {
    %c0 = arith.constant 0 : index
    %c0_0 = arith.constant 0 : index
    %c0_1 = arith.constant 0 : index
    %0 = vector.load %arg0[%c0, %c0_0, %c0_1] : memref<2x57x16xf32, #tpu.memory_space<vmem>>, vector<2x57x16xf32>
    %1 = vector.shape_cast %0 : vector<2x57x16xf32> to vector<114x16xf32>
    %c0_2 = arith.constant 0 : index
    %c0_3 = arith.constant 0 : index
    %2 = vector.load %arg1[%c0_2, %c0_3] : memref<16x32xf32, #tpu.memory_space<vmem>>, vector<16x32xf32>
    %cst = arith.constant dense<0.000000e+00> : vector<114x32xf32>
    %3 = tpu.matmul %1, %2, %cst {dimension_numbers = #tpu.dot_dimension_numbers<[1], [0], [0], [1], [0, 0, 1, 1], [], []>} : vector<114x16xf32>, vector<16x32xf32>, vector<114x32xf32> -> vector<114x32xf32>
    %4 = vector.shape_cast %3 : vector<114x32xf32> to vector<2x57x32xf32>
    %c0_4 = arith.constant 0 : index
    %c0_5 = arith.constant 0 : index
    %5 = vector.load %arg2[%c0_4, %c0_5] : memref<57x57xf32, #tpu.memory_space<vmem>>, vector<57x57xf32>
    %c0_6 = arith.constant 0 : index
    %c0_7 = arith.constant 0 : index
    %6 = vector.load %arg3[%c0_6, %c0_7] : memref<1x32xf32, #tpu.memory_space<vmem>>, vector<1x32xf32>
    %7 = vector.shape_cast %6 : vector<1x32xf32> to vector<1x32xf32>
    %8 = vector.broadcast %7 : vector<1x32xf32> to vector<57x32xf32>
    %9 = vector.extract_strided_slice %4 {offsets = [0, 0, 0], sizes = [1, 57, 32], strides = [1, 1, 1]} : vector<2x57x32xf32> to vector<1x57x32xf32>
    %10 = vector.shape_cast %9 : vector<1x57x32xf32> to vector<57x32xf32>
    %cst_8 = arith.constant dense<0.000000e+00> : vector<57x32xf32>
    %11 = tpu.matmul %5, %10, %cst_8 {dimension_numbers = #tpu.dot_dimension_numbers<[1], [0], [0], [1], [0, 0, 1, 1], [], []>} : vector<57x57xf32>, vector<57x32xf32>, vector<57x32xf32> -> vector<57x32xf32>
    %12 = arith.addf %11, %8 : vector<57x32xf32>
    %c0_9 = arith.constant 0 : index
    %c0_10 = arith.constant 0 : index
    %c0_11 = arith.constant 0 : index
    %13 = vector.load %arg4[%c0_9, %c0_10, %c0_11] : memref<2x57x32xf32, #tpu.memory_space<vmem>>, vector<1x57x32xf32>
    %14 = vector.shape_cast %13 : vector<1x57x32xf32> to vector<57x32xf32>
    %15 = vector.shape_cast %12 : vector<57x32xf32> to vector<1x57x32xf32>
    tpu.vector_store %arg4[%c0_9, %c0_10, %c0_11], %15 {strides = array<i32>} : memref<2x57x32xf32, #tpu.memory_space<vmem>>, vector<1x57x32xf32>,
    %16 = vector.extract_strided_slice %4 {offsets = [1, 0, 0], sizes = [1, 57, 32], strides = [1, 1, 1]} : vector<2x57x32xf32> to vector<1x57x32xf32>
    %17 = vector.shape_cast %16 : vector<1x57x32xf32> to vector<57x32xf32>
    %cst_12 = arith.constant dense<0.000000e+00> : vector<57x32xf32>
    %18 = tpu.matmul %5, %17, %cst_12 {dimension_numbers = #tpu.dot_dimension_numbers<[1], [0], [0], [1], [0, 0, 1, 1], [], []>} : vector<57x57xf32>, vector<57x32xf32>, vector<57x32xf32> -> vector<57x32xf32>
    %19 = arith.addf %18, %8 : vector<57x32xf32>
    %c1 = arith.constant 1 : index
    %c0_13 = arith.constant 0 : index
    %c0_14 = arith.constant 0 : index
    %20 = vector.load %arg4[%c1, %c0_13, %c0_14] : memref<2x57x32xf32, #tpu.memory_space<vmem>>, vector<1x57x32xf32>
    %21 = vector.shape_cast %20 : vector<1x57x32xf32> to vector<57x32xf32>
    %22 = vector.shape_cast %19 : vector<57x32xf32> to vector<1x57x32xf32>
    tpu.vector_store %arg4[%c1, %c0_13, %c0_14], %22 {strides = array<i32>} : memref<2x57x32xf32, #tpu.memory_space<vmem>>, vector<1x57x32xf32>,
    return
  }
}

</mosaic_0001>

<llo_original>
// kernel: tpu_custom_call.1
$region0: #{tpu_custom_call.1}
  #allocation0 [shape = 'u32[]', space=smem, size = 0x4, offset = 0x4, fixed_abs, tag = 'smem constant byte address 0x4 - core index']
  #allocation1 [shape = 'u32[72,128]{1,0:T(1,128)}', space=vmem, size = 0x9000, scoped, tag = 'internal scratch']
  %s0 = inlined_call_operand.vmem [shape: f32[2,57,16], index: 0, kind: input, shape index: {}]
  %s1 = inlined_call_operand.vmem [shape: f32[16,32], index: 1, kind: input, shape index: {}]
  %s2 = inlined_call_operand.vmem [shape: f32[57,57], index: 2, kind: input, shape index: {}]
  %s3 = inlined_call_operand.vmem [shape: f32[1,32], index: 3, kind: input, shape index: {}]
  %s4 = inlined_call_operand.vmem [shape: f32[2,57,32], index: 4, kind: output, shape index: {}]
  %s5 = sld [smem:[#allocation0]]
  $region26: #{tpu_custom_call.1} parent=0
    _
  %s7 = ssub.s32 1, %s5
  %s8 = scalar_select 0, %s7, %s5
  // Predicated region
  $region2: #{tpu_custom_call.1} parent=0 // pred_check
    _
  $region3: #{tpu_custom_call.1} parent=0 // pred_check_branch
    %10 = sbr.rel (0) target = $region5
  $region4: #{tpu_custom_call.1} parent=0 // pred_region
    _
  $region5: #{tpu_custom_call.1} parent=0 // pred_fallthru
    _
  // Predicated region
  $region6: #{tpu_custom_call.1} parent=0 // pred_check
    _
  $region7: #{tpu_custom_call.1} parent=0 // pred_check_branch
    %12 = sbr.rel (0) target = $region9
  $region8: #{tpu_custom_call.1} parent=0 // pred_region
    _
  $region9: #{tpu_custom_call.1} parent=0 // pred_fallthru
    _
  // Predicated region
  $region10: #{tpu_custom_call.1} parent=0 // pred_check
    _
  $region11: #{tpu_custom_call.1} parent=0 // pred_check_branch
    %14 = sbr.rel (0) target = $region13
  $region12: #{tpu_custom_call.1} parent=0 // pred_region
    _
  $region13: #{tpu_custom_call.1} parent=0 // pred_fallthru
    _
  // Predicated region
  $region14: #{tpu_custom_call.1} parent=0 // pred_check
    _
  $region15: #{tpu_custom_call.1} parent=0 // pred_check_branch
    %16 = sbr.rel (0) target = $region17
  $region16: #{tpu_custom_call.1} parent=0 // pred_region
    _
  $region17: #{tpu_custom_call.1} parent=0 // pred_fallthru
    _
  %v17 = vld [vmem:[%s0] sm:$0xff]
  %v18 = vld [vmem:[%s0 + $0x8] sm:$0xff]
  %v19 = vld [vmem:[%s0 + $0x10] sm:$0xff]
  %v20 = vld [vmem:[%s0 + $0x18] sm:$0xff]
  %v21 = vld [vmem:[%s0 + $0x20] sm:$0xff]
  %v22 = vld [vmem:[%s0 + $0x28] sm:$0xff]
  %v23 = vld [vmem:[%s0 + $0x30] sm:$0xff]
  %v24 = vld [vmem:[%s0 + $0x38] sm:$0x1]
  %v25 = vld [vmem:[%s0 + $0x40] sm:$0xff]
  %v26 = vld [vmem:[%s0 + $0x48] sm:$0xff]
  %v27 = vld [vmem:[%s0 + $0x50] sm:$0xff]
  %v28 = vld [vmem:[%s0 + $0x58] sm:$0xff]
  %v29 = vld [vmem:[%s0 + $0x60] sm:$0xff]
  %v30 = vld [vmem:[%s0 + $0x68] sm:$0xff]
  %v31 = vld [vmem:[%s0 + $0x70] sm:$0xff]
  %v32 = vld [vmem:[%s0 + $0x78] sm:$0x1]
  %v49 = vrot.slane %v17, 1
  %v50 = vrot.slane %v17, 2
  %v51 = vrot.slane %v17, 3
  %v52 = vrot.slane %v17, 4
  %v53 = vrot.slane %v17, 5
  %v54 = vrot.slane %v17, 6
  %v55 = vrot.slane %v17, 7
  %v56 = vrot.slane %v18, 1
  %v57 = vrot.slane %v18, 2
  %v58 = vrot.slane %v18, 3
  %v59 = vrot.slane %v18, 4
  %v60 = vrot.slane %v18, 5
  %v61 = vrot.slane %v18, 6
  %v62 = vrot.slane %v18, 7
  %v63 = vrot.slane %v19, 1
  %v64 = vrot.slane %v19, 2
  %v65 = vrot.slane %v19, 3
  %v66 = vrot.slane %v19, 4
  %v67 = vrot.slane %v19, 5
  %v68 = vrot.slane %v19, 6
  %v69 = vrot.slane %v19, 7
  %v70 = vrot.slane %v20, 1
  %v71 = vrot.slane %v20, 2
  %v72 = vrot.slane %v20, 3
  %v73 = vrot.slane %v20, 4
  %v74 = vrot.slane %v20, 5
  %v75 = vrot.slane %v20, 6
  %v76 = vrot.slane %v20, 7
  %v77 = vrot.slane %v21, 1
  %v78 = vrot.slane %v21, 2
  %v79 = vrot.slane %v21, 3
  %v80 = vrot.slane %v21, 4
  %v81 = vrot.slane %v21, 5
  %v82 = vrot.slane %v21, 6
  %v83 = vrot.slane %v21, 7
  %v84 = vrot.slane %v22, 1
  %v85 = vrot.slane %v22, 2
  %v86 = vrot.slane %v22, 3
  %v87 = vrot.slane %v22, 4
  %v88 = vrot.slane %v22, 5
  %v89 = vrot.slane %v22, 6
  %v90 = vrot.slane %v22, 7
  %v91 = vrot.slane %v23, 1
  %v92 = vrot.slane %v23, 2
  %v93 = vrot.slane %v23, 3
  %v94 = vrot.slane %v23, 4
  %v95 = vrot.slane %v23, 5
  %v96 = vrot.slane %v23, 6
  %v97 = vrot.slane %v23, 7
  %v98 = vrot.slane %v25, 1
  %v99 = vrot.slane %v25, 2
  %v100 = vrot.slane %v25, 3
  %v101 = vrot.slane %v25, 4
  %v102 = vrot.slane %v25, 5
  %v103 = vrot.slane %v25, 6
  %v104 = vrot.slane %v25, 7
  %v105 = vrot.slane %v26, 1
  %v106 = vrot.slane %v26, 2
  %v107 = vrot.slane %v26, 3
  %v108 = vrot.slane %v26, 4
  %v109 = vrot.slane %v26, 5
  %v110 = vrot.slane %v26, 6
  %v111 = vrot.slane %v26, 7
  %v112 = vrot.slane %v27, 1
  %v113 = vrot.slane %v27, 2
  %v114 = vrot.slane %v27, 3
  %v115 = vrot.slane %v27, 4
  %v116 = vrot.slane %v27, 5
  %v117 = vrot.slane %v27, 6
  %v118 = vrot.slane %v27, 7
  %v119 = vrot.slane %v28, 1
  %v120 = vrot.slane %v28, 2
  %v121 = vrot.slane %v28, 3
  %v122 = vrot.slane %v28, 4
  %v123 = vrot.slane %v28, 5
  %v124 = vrot.slane %v28, 6
  %v125 = vrot.slane %v28, 7
  %v126 = vrot.slane %v29, 1
  %v127 = vrot.slane %v29, 2
  %v128 = vrot.slane %v29, 3
  %v129 = vrot.slane %v29, 4
  %v130 = vrot.slane %v29, 5
  %v131 = vrot.slane %v29, 6
  %v132 = vrot.slane %v29, 7
  %v133 = vrot.slane %v30, 1
  %v134 = vrot.slane %v30, 2
  %v135 = vrot.slane %v30, 3
  %v136 = vrot.slane %v30, 4
  %v137 = vrot.slane %v30, 5
  %v138 = vrot.slane %v30, 6
  %v139 = vrot.slane %v30, 7
  %v140 = vrot.slane %v31, 1
  %v141 = vrot.slane %v31, 2
  %v142 = vrot.slane %v31, 3
  %v143 = vrot.slane %v31, 4
  %v144 = vrot.slane %v31, 5
  %v145 = vrot.slane %v31, 6
  %v146 = vrot.slane %v31, 7
  %v147 = vld [vmem:[%s1] sm:$0xff]
  %v148 = vld [vmem:[%s1 + $0x8] sm:$0xff]
  %149 = vst [vmem:[#allocation1] ss:$9 sm:$0xff] %v17
  %s150 = scalar_lea.vmem [#allocation1], 1
  %151 = vst [vmem:[%s150] ss:$9 sm:$0xff] %v49
  %s152 = scalar_lea.vmem [#allocation1], 2
  %153 = vst [vmem:[%s152] ss:$9 sm:$0xff] %v50
  %s154 = scalar_lea.vmem [#allocation1], 3
  %155 = vst [vmem:[%s154] ss:$9 sm:$0xff] %v51
  %s156 = scalar_lea.vmem [#allocation1], 4
  %157 = vst [vmem:[%s156] ss:$9 sm:$0xff] %v52
  %s158 = scalar_lea.vmem [#allocation1], 5
  %159 = vst [vmem:[%s158] ss:$9 sm:$0xff] %v53
  %s160 = scalar_lea.vmem [#allocation1], 6
  %161 = vst [vmem:[%s160] ss:$9 sm:$0xff] %v54
  %s162 = scalar_lea.vmem [#allocation1], 7
  %163 = vst [vmem:[%s162] ss:$9 sm:$0xff] %v55
  %v164 = vld [vmem:[#allocation1] sm:$0xff]
  %165 = vst [vmem:[#allocation1] ss:$9 sm:$0xff] %v18
  %166 = vst [vmem:[%s150] ss:$9 sm:$0xff] %v56
  %167 = vst [vmem:[%s152] ss:$9 sm:$0xff] %v57
  %168 = vst [vmem:[%s154] ss:$9 sm:$0xff] %v58
  %169 = vst [vmem:[%s156] ss:$9 sm:$0xff] %v59
  %170 = vst [vmem:[%s158] ss:$9 sm:$0xff] %v60
  %171 = vst [vmem:[%s160] ss:$9 sm:$0xff] %v61
  %172 = vst [vmem:[%s162] ss:$9 sm:$0xff] %v62
  %v173 = vld [vmem:[#allocation1] sm:$0xff]
  %174 = vst [vmem:[#allocation1] ss:$9 sm:$0xff] %v19
  %175 = vst [vmem:[%s150] ss:$9 sm:$0xff] %v63
  %176 = vst [vmem:[%s152] ss:$9 sm:$0xff] %v64
  %177 = vst [vmem:[%s154] ss:$9 sm:$0xff] %v65
  %178 = vst [vmem:[%s156] ss:$9 sm:$0xff] %v66
  %179 = vst [vmem:[%s158] ss:$9 sm:$0xff] %v67
  %180 = vst [vmem:[%s160] ss:$9 sm:$0xff] %v68
  %181 = vst [vmem:[%s162] ss:$9 sm:$0xff] %v69
  %v182 = vld [vmem:[#allocation1] sm:$0xff]
  %183 = vst [vmem:[#allocation1] ss:$9 sm:$0xff] %v20
  %184 = vst [vmem:[%s150] ss:$9 sm:$0xff] %v70
  %185 = vst [vmem:[%s152] ss:$9 sm:$0xff] %v71
  %186 = vst [vmem:[%s154] ss:$9 sm:$0xff] %v72
  %187 = vst [vmem:[%s156] ss:$9 sm:$0xff] %v73
  %188 = vst [vmem:[%s158] ss:$9 sm:$0xff] %v74
  %189 = vst [vmem:[%s160] ss:$9 sm:$0xff] %v75
  %190 = vst [vmem:[%s162] ss:$9 sm:$0xff] %v76
  %v191 = vld [vmem:[#allocation1] sm:$0xff]
  %192 = vst [vmem:[#allocation1] ss:$9 sm:$0xff] %v21
  %193 = vst [vmem:[%s150] ss:$9 sm:$0xff] %v77
  %194 = vst [vmem:[%s152] ss:$9 sm:$0xff] %v78
  %195 = vst [vmem:[%s154] ss:$9 sm:$0xff] %v79
  %196 = vst [vmem:[%s156] ss:$9 sm:$0xff] %v80
  %197 = vst [vmem:[%s158] ss:$9 sm:$0xff] %v81
  %198 = vst [vmem:[%s160] ss:$9 sm:$0xff] %v82
  %199 = vst [vmem:[%s162] ss:$9 sm:$0xff] %v83
  %v200 = vld [vmem:[#allocation1] sm:$0xff]
  %201 = vst [vmem:[#allocation1] ss:$9 sm:$0xff] %v22
  %202 = vst [vmem:[%s150] ss:$9 sm:$0xff] %v84
  %203 = vst [vmem:[%s152] ss:$9 sm:$0xff] %v85
  %204 = vst [vmem:[%s154] ss:$9 sm:$0xff] %v86
  %205 = vst [vmem:[%s156] ss:$9 sm:$0xff] %v87
  %206 = vst [vmem:[%s158] ss:$9 sm:$0xff] %v88
  %207 = vst [vmem:[%s160] ss:$9 sm:$0xff] %v89
  %208 = vst [vmem:[%s162] ss:$9 sm:$0xff] %v90
  %v209 = vld [vmem:[#allocation1] sm:$0xff]
  %210 = vst [vmem:[#allocation1] ss:$9 sm:$0xff] %v23
  %211 = vst [vmem:[%s150] ss:$9 sm:$0xff] %v91
  %212 = vst [vmem:[%s152] ss:$9 sm:$0xff] %v92
  %213 = vst [vmem:[%s154] ss:$9 sm:$0xff] %v93
  %214 = vst [vmem:[%s156] ss:$9 sm:$0xff] %v94
  %215 = vst [vmem:[%s158] ss:$9 sm:$0xff] %v95
  %216 = vst [vmem:[%s160] ss:$9 sm:$0xff] %v96
  %217 = vst [vmem:[%s162] ss:$9 sm:$0xff] %v97
  %v218 = vld [vmem:[#allocation1] sm:$0xff]
  %219 = vst [vmem:[#allocation1] ss:$9 sm:$0xff] %v24
  %220 = vst [vmem:[%s150] ss:$9 sm:$0xff] %v25
  %221 = vst [vmem:[%s152] ss:$9 sm:$0xff] %v98
  %222 = vst [vmem:[%s154] ss:$9 sm:$0xff] %v99
  %223 = vst [vmem:[%s156] ss:$9 sm:$0xff] %v100
  %224 = vst [vmem:[%s158] ss:$9 sm:$0xff] %v101
  %225 = vst [vmem:[%s160] ss:$9 sm:$0xff] %v102
  %226 = vst [vmem:[%s162] ss:$9 sm:$0xff] %v103
  %v227 = vld [vmem:[#allocation1] sm:$0xff]
  %228 = vst [vmem:[#allocation1] ss:$9 sm:$0xff] %v104
  %229 = vst [vmem:[%s150] ss:$9 sm:$0xff] %v26
  %230 = vst [vmem:[%s152] ss:$9 sm:$0xff] %v105
  %231 = vst [vmem:[%s154] ss:$9 sm:$0xff] %v106
  %232 = vst [vmem:[%s156] ss:$9 sm:$0xff] %v107
  %233 = vst [vmem:[%s158] ss:$9 sm:$0xff] %v108
  %234 = vst [vmem:[%s160] ss:$9 sm:$0xff] %v109
  %235 = vst [vmem:[%s162] ss:$9 sm:$0xff] %v110
  %v236 = vld [vmem:[#allocation1] sm:$0xff]
  %237 = vst [vmem:[#allocation1] ss:$9 sm:$0xff] %v111
  %238 = vst [vmem:[%s150] ss:$9 sm:$0xff] %v27
  %239 = vst [vmem:[%s152] ss:$9 sm:$0xff] %v112
  %240 = vst [vmem:[%s154] ss:$9 sm:$0xff] %v113
  %241 = vst [vmem:[%s156] ss:$9 sm:$0xff] %v114
  %242 = vst [vmem:[%s158] ss:$9 sm:$0xff] %v115
  %243 = vst [vmem:[%s160] ss:$9 sm:$0xff] %v116
  %244 = vst [vmem:[%s162] ss:$9 sm:$0xff] %v117
  %v245 = vld [vmem:[#allocation1] sm:$0xff]
  %246 = vst [vmem:[#allocation1] ss:$9 sm:$0xff] %v118
  %247 = vst [vmem:[%s150] ss:$9 sm:$0xff] %v28
  %248 = vst [vmem:[%s152] ss:$9 sm:$0xff] %v119
  %249 = vst [vmem:[%s154] ss:$9 sm:$0xff] %v120
  %250 = vst [vmem:[%s156] ss:$9 sm:$0xff] %v121
  %251 = vst [vmem:[%s158] ss:$9 sm:$0xff] %v122
  %252 = vst [vmem:[%s160] ss:$9 sm:$0xff] %v123
  %253 = vst [vmem:[%s162] ss:$9 sm:$0xff] %v124
  %v254 = vld [vmem:[#allocation1] sm:$0xff]
  %255 = vst [vmem:[#allocation1] ss:$9 sm:$0xff] %v125
  %256 = vst [vmem:[%s150] ss:$9 sm:$0xff] %v29
  %257 = vst [vmem:[%s152] ss:$9 sm:$0xff] %v126
  %258 = vst [vmem:[%s154] ss:$9 sm:$0xff] %v127
  %259 = vst [vmem:[%s156] ss:$9 sm:$0xff] %v128
  %260 = vst [vmem:[%s158] ss:$9 sm:$0xff] %v129
  %261 = vst [vmem:[%s160] ss:$9 sm:$0xff] %v130
  %262 = vst [vmem:[%s162] ss:$9 sm:$0xff] %v131
  %v263 = vld [vmem:[#allocation1] sm:$0xff]
  %264 = vst [vmem:[#allocation1] ss:$9 sm:$0xff] %v132
  %265 = vst [vmem:[%s150] ss:$9 sm:$0xff] %v30
  %266 = vst [vmem:[%s152] ss:$9 sm:$0xff] %v133
  %267 = vst [vmem:[%s154] ss:$9 sm:$0xff] %v134
  %268 = vst [vmem:[%s156] ss:$9 sm:$0xff] %v135
  %269 = vst [vmem:[%s158] ss:$9 sm:$0xff] %v136
  %270 = vst [vmem:[%s160] ss:$9 sm:$0xff] %v137
  %271 = vst [vmem:[%s162] ss:$9 sm:$0xff] %v138
  %v272 = vld [vmem:[#allocation1] sm:$0xff]
  %273 = vst [vmem:[#allocation1] ss:$9 sm:$0xff] %v139
  %274 = vst [vmem:[%s150] ss:$9 sm:$0xff] %v31
  %275 = vst [vmem:[%s152] ss:$9 sm:$0xff] %v140
  %276 = vst [vmem:[%s154] ss:$9 sm:$0xff] %v141
  %277 = vst [vmem:[%s156] ss:$9 sm:$0xff] %v142
  %278 = vst [vmem:[%s158] ss:$9 sm:$0xff] %v143
  %279 = vst [vmem:[%s160] ss:$9 sm:$0xff] %v144
  %280 = vst [vmem:[%s162] ss:$9 sm:$0xff] %v145
  %v281 = vld [vmem:[#allocation1] sm:$0xff]
  %282 = vst [vmem:[#allocation1] ss:$9 sm:$0xff] %v146
  %283 = vst [vmem:[%s150] ss:$9 sm:$0xff] %v32
  %v284 = vld [vmem:[#allocation1] sm:$0xff]
  %vm285 = vcmask 130048
  %v286 = vsel %vm285, %v164, 0
  %v288 = vsel %vm285, %v173, 0
  %v290 = vsel %vm285, %v182, 0
  %v292 = vsel %vm285, %v191, 0
  %v294 = vsel %vm285, %v200, 0
  %v296 = vsel %vm285, %v209, 0
  %v298 = vsel %vm285, %v218, 0
  %v300 = vsel %vm285, %v227, 0
  %v302 = vsel %vm285, %v236, 0
  %v304 = vsel %vm285, %v245, 0
  %v306 = vsel %vm285, %v254, 0
  %v308 = vsel %vm285, %v263, 0
  %v310 = vsel %vm285, %v272, 0
  %v312 = vsel %vm285, %v281, 0
  %v314 = vsel %vm285, %v284, 0
  %316 = vmatpush.msra.mxu0 0.0
  %317 = vmatpush.msra.mxu0 0.0
  %318 = vmatpush.msra.mxu0 0.0
  %319 = vmatpush.msra.mxu0 0.0
  %320 = vmatpush.msra.mxu0 0.0
  %321 = vmatpush.msra.mxu0 0.0
  %322 = vmatpush.msra.mxu0 0.0
  %323 = vmatpush.msra.mxu0 0.0
  %324 = vmatpush.msra.mxu0 0.0
  %325 = vmatpush.msra.mxu0 0.0
  %326 = vmatpush.msra.mxu0 0.0
  %327 = vmatpush.msra.mxu0 0.0
  %328 = vmatpush.msra.mxu0 0.0
  %329 = vmatpush.msra.mxu0 0.0
  %330 = vmatpush.msra.mxu0 %v148
  %331 = vmatpush.msra.mxu0 %v147
  %332 = vmatmul.f32.gmra.mxu0 %v286
  %v333 = vpop.f32.mrf.mxu0
  %v334 = vadd.f32 0.0, %v333
  %335 = vmatmul.f32.gmra.mxu0 %v288
  %v336 = vpop.f32.mrf.mxu0
  %v337 = vadd.f32 0.0, %v336
  %338 = vmatmul.f32.gmra.mxu0 %v290
  %v339 = vpop.f32.mrf.mxu0
  %v340 = vadd.f32 0.0, %v339
  %341 = vmatmul.f32.gmra.mxu0 %v292
  %v342 = vpop.f32.mrf.mxu0
  %v343 = vadd.f32 0.0, %v342
  %344 = vmatmul.f32.gmra.mxu0 %v294
  %v345 = vpop.f32.mrf.mxu0
  %v346 = vadd.f32 0.0, %v345
  %347 = vmatmul.f32.gmra.mxu0 %v296
  %v348 = vpop.f32.mrf.mxu0
  %v349 = vadd.f32 0.0, %v348
  %350 = vmatmul.f32.gmra.mxu0 %v298
  %v351 = vpop.f32.mrf.mxu0
  %v352 = vadd.f32 0.0, %v351
  %353 = vmatmul.f32.gmra.mxu0 %v300
  %v354 = vpop.f32.mrf.mxu0
  %v355 = vadd.f32 0.0, %v354
  %356 = vmatmul.f32.gmra.mxu0 %v302
  %v357 = vpop.f32.mrf.mxu0
  %v358 = vadd.f32 0.0, %v357
  %359 = vmatmul.f32.gmra.mxu0 %v304
  %v360 = vpop.f32.mrf.mxu0
  %v361 = vadd.f32 0.0, %v360
  %362 = vmatmul.f32.gmra.mxu0 %v306
  %v363 = vpop.f32.mrf.mxu0
  %v364 = vadd.f32 0.0, %v363
  %365 = vmatmul.f32.gmra.mxu0 %v308
  %v366 = vpop.f32.mrf.mxu0
  %v367 = vadd.f32 0.0, %v366
  %368 = vmatmul.f32.gmra.mxu0 %v310
  %v369 = vpop.f32.mrf.mxu0
  %v370 = vadd.f32 0.0, %v369
  %371 = vmatmul.f32.gmra.mxu0 %v312
  %v372 = vpop.f32.mrf.mxu0
  %v373 = vadd.f32 0.0, %v372
  %374 = vmatmul.f32.gmra.mxu0 %v314
  %v375 = vpop.f32.mrf.mxu0
  %v376 = vadd.f32 0.0, %v375
  %377 = vdwg.mxu0
  %v393 = vrot.slane %v334, 1
  %v394 = vrot.slane %v334, 2
  %v395 = vrot.slane %v334, 3
  %v396 = vrot.slane %v334, 4
  %v397 = vrot.slane %v334, 5
  %v398 = vrot.slane %v334, 6
  %v399 = vrot.slane %v334, 7
  %v400 = vrot.slane %v337, 1
  %v401 = vrot.slane %v337, 2
  %v402 = vrot.slane %v337, 3
  %v403 = vrot.slane %v337, 4
  %v404 = vrot.slane %v337, 5
  %v405 = vrot.slane %v337, 6
  %v406 = vrot.slane %v337, 7
  %v407 = vrot.slane %v340, 1
  %v408 = vrot.slane %v340, 2
  %v409 = vrot.slane %v340, 3
  %v410 = vrot.slane %v340, 4
  %v411 = vrot.slane %v340, 5
  %v412 = vrot.slane %v340, 6
  %v413 = vrot.slane %v340, 7
  %v414 = vrot.slane %v343, 1
  %v415 = vrot.slane %v343, 2
  %v416 = vrot.slane %v343, 3
  %v417 = vrot.slane %v343, 4
  %v418 = vrot.slane %v343, 5
  %v419 = vrot.slane %v343, 6
  %v420 = vrot.slane %v343, 7
  %v421 = vrot.slane %v346, 1
  %v422 = vrot.slane %v346, 2
  %v423 = vrot.slane %v346, 3
  %v424 = vrot.slane %v346, 4
  %v425 = vrot.slane %v346, 5
  %v426 = vrot.slane %v346, 6
  %v427 = vrot.slane %v346, 7
  %v428 = vrot.slane %v349, 1
  %v429 = vrot.slane %v349, 2
  %v430 = vrot.slane %v349, 3
  %v431 = vrot.slane %v349, 4
  %v432 = vrot.slane %v349, 5
  %v433 = vrot.slane %v349, 6
  %v434 = vrot.slane %v349, 7
  %v435 = vrot.slane %v352, 1
  %v436 = vrot.slane %v352, 2
  %v437 = vrot.slane %v352, 3
  %v438 = vrot.slane %v352, 4
  %v439 = vrot.slane %v352, 5
  %v440 = vrot.slane %v352, 6
  %v441 = vrot.slane %v352, 7
  %v442 = vrot.slane %v355, 1
  %v443 = vrot.slane %v355, 2
  %v444 = vrot.slane %v355, 3
  %v445 = vrot.slane %v355, 4
  %v446 = vrot.slane %v355, 5
  %v447 = vrot.slane %v355, 6
  %v448 = vrot.slane %v355, 7
  %v449 = vrot.slane %v358, 1
  %v450 = vrot.slane %v358, 2
  %v451 = vrot.slane %v358, 3
  %v452 = vrot.slane %v358, 4
  %v453 = vrot.slane %v358, 5
  %v454 = vrot.slane %v358, 6
  %v455 = vrot.slane %v358, 7
  %v456 = vrot.slane %v361, 1
  %v457 = vrot.slane %v361, 2
  %v458 = vrot.slane %v361, 3
  %v459 = vrot.slane %v361, 4
  %v460 = vrot.slane %v361, 5
  %v461 = vrot.slane %v361, 6
  %v462 = vrot.slane %v361, 7
  %v463 = vrot.slane %v364, 1
  %v464 = vrot.slane %v364, 2
  %v465 = vrot.slane %v364, 3
  %v466 = vrot.slane %v364, 4
  %v467 = vrot.slane %v364, 5
  %v468 = vrot.slane %v364, 6
  %v469 = vrot.slane %v364, 7
  %v470 = vrot.slane %v367, 1
  %v471 = vrot.slane %v367, 2
  %v472 = vrot.slane %v367, 3
  %v473 = vrot.slane %v367, 4
  %v474 = vrot.slane %v367, 5
  %v475 = vrot.slane %v367, 6
  %v476 = vrot.slane %v367, 7
  %v477 = vrot.slane %v370, 1
  %v478 = vrot.slane %v370, 2
  %v479 = vrot.slane %v370, 3
  %v480 = vrot.slane %v370, 4
  %v481 = vrot.slane %v370, 5
  %v482 = vrot.slane %v370, 6
  %v483 = vrot.slane %v370, 7
  %v484 = vrot.slane %v373, 1
  %v485 = vrot.slane %v373, 2
  %v486 = vrot.slane %v373, 3
  %v487 = vrot.slane %v373, 4
  %v488 = vrot.slane %v373, 5
  %v489 = vrot.slane %v373, 6
  %v490 = vrot.slane %v373, 7
  %v491 = vrot.slane %v376, 1
  %v492 = vld [vmem:[%s2] sm:$0xff]
  %v493 = vld [vmem:[%s2 + $0x8] sm:$0xff]
  %v494 = vld [vmem:[%s2 + $0x10] sm:$0xff]
  %v495 = vld [vmem:[%s2 + $0x18] sm:$0xff]
  %v496 = vld [vmem:[%s2 + $0x20] sm:$0xff]
  %v497 = vld [vmem:[%s2 + $0x28] sm:$0xff]
  %v498 = vld [vmem:[%s2 + $0x30] sm:$0xff]
  %v499 = vld [vmem:[%s2 + $0x38] sm:$0x1]
  %v500 = vld [vmem:[%s3] sm:$0x1]
  %v502 = vperm.slane %v500, 0
  %504 = vst [vmem:[#allocation1] ss:$9 sm:$0xff] %v334
  %s505 = scalar_lea.vmem [#allocation1], 1
  %506 = vst [vmem:[%s505] ss:$9 sm:$0xff] %v393
  %s507 = scalar_lea.vmem [#allocation1], 2
  %508 = vst [vmem:[%s507] ss:$9 sm:$0xff] %v394
  %s509 = scalar_lea.vmem [#allocation1], 3
  %510 = vst [vmem:[%s509] ss:$9 sm:$0xff] %v395
  %s511 = scalar_lea.vmem [#allocation1], 4
  %512 = vst [vmem:[%s511] ss:$9 sm:$0xff] %v396
  %s513 = scalar_lea.vmem [#allocation1], 5
  %514 = vst [vmem:[%s513] ss:$9 sm:$0xff] %v397
  %s515 = scalar_lea.vmem [#allocation1], 6
  %516 = vst [vmem:[%s515] ss:$9 sm:$0xff] %v398
  %s517 = scalar_lea.vmem [#allocation1], 7
  %518 = vst [vmem:[%s517] ss:$9 sm:$0xff] %v399
  %v519 = vld [vmem:[#allocation1] sm:$0xff]
  %520 = vst [vmem:[#allocation1] ss:$9 sm:$0xff] %v337
  %521 = vst [vmem:[%s505] ss:$9 sm:$0xff] %v400
  %522 = vst [vmem:[%s507] ss:$9 sm:$0xff] %v401
  %523 = vst [vmem:[%s509] ss:$9 sm:$0xff] %v402
  %524 = vst [vmem:[%s511] ss:$9 sm:$0xff] %v403
  %525 = vst [vmem:[%s513] ss:$9 sm:$0xff] %v404
  %526 = vst [vmem:[%s515] ss:$9 sm:$0xff] %v405
  %527 = vst [vmem:[%s517] ss:$9 sm:$0xff] %v406
  %v528 = vld [vmem:[#allocation1] sm:$0xff]
  %529 = vst [vmem:[#allocation1] ss:$9 sm:$0xff] %v340
  %530 = vst [vmem:[%s505] ss:$9 sm:$0xff] %v407
  %531 = vst [vmem:[%s507] ss:$9 sm:$0xff] %v408
  %532 = vst [vmem:[%s509] ss:$9 sm:$0xff] %v409
  %533 = vst [vmem:[%s511] ss:$9 sm:$0xff] %v410
  %534 = vst [vmem:[%s513] ss:$9 sm:$0xff] %v411
  %535 = vst [vmem:[%s515] ss:$9 sm:$0xff] %v412
  %536 = vst [vmem:[%s517] ss:$9 sm:$0xff] %v413
  %v537 = vld [vmem:[#allocation1] sm:$0xff]
  %538 = vst [vmem:[#allocation1] ss:$9 sm:$0xff] %v343
  %539 = vst [vmem:[%s505] ss:$9 sm:$0xff] %v414
  %540 = vst [vmem:[%s507] ss:$9 sm:$0xff] %v415
  %541 = vst [vmem:[%s509] ss:$9 sm:$0xff] %v416
  %542 = vst [vmem:[%s511] ss:$9 sm:$0xff] %v417
  %543 = vst [vmem:[%s513] ss:$9 sm:$0xff] %v418
  %544 = vst [vmem:[%s515] ss:$9 sm:$0xff] %v419
  %545 = vst [vmem:[%s517] ss:$9 sm:$0xff] %v420
  %v546 = vld [vmem:[#allocation1] sm:$0xff]
  %547 = vst [vmem:[#allocation1] ss:$9 sm:$0xff] %v346
  %548 = vst [vmem:[%s505] ss:$9 sm:$0xff] %v421
  %549 = vst [vmem:[%s507] ss:$9 sm:$0xff] %v422
  %550 = vst [vmem:[%s509] ss:$9 sm:$0xff] %v423
  %551 = vst [vmem:[%s511] ss:$9 sm:$0xff] %v424
  %552 = vst [vmem:[%s513] ss:$9 sm:$0xff] %v425
  %553 = vst [vmem:[%s515] ss:$9 sm:$0xff] %v426
  %554 = vst [vmem:[%s517] ss:$9 sm:$0xff] %v427
  %v555 = vld [vmem:[#allocation1] sm:$0xff]
  %556 = vst [vmem:[#allocation1] ss:$9 sm:$0xff] %v349
  %557 = vst [vmem:[%s505] ss:$9 sm:$0xff] %v428
  %558 = vst [vmem:[%s507] ss:$9 sm:$0xff] %v429
  %559 = vst [vmem:[%s509] ss:$9 sm:$0xff] %v430
  %560 = vst [vmem:[%s511] ss:$9 sm:$0xff] %v431
  %561 = vst [vmem:[%s513] ss:$9 sm:$0xff] %v432
  %562 = vst [vmem:[%s515] ss:$9 sm:$0xff] %v433
  %563 = vst [vmem:[%s517] ss:$9 sm:$0xff] %v434
  %v564 = vld [vmem:[#allocation1] sm:$0xff]
  %565 = vst [vmem:[#allocation1] ss:$9 sm:$0xff] %v352
  %566 = vst [vmem:[%s505] ss:$9 sm:$0xff] %v435
  %567 = vst [vmem:[%s507] ss:$9 sm:$0xff] %v436
  %568 = vst [vmem:[%s509] ss:$9 sm:$0xff] %v437
  %569 = vst [vmem:[%s511] ss:$9 sm:$0xff] %v438
  %570 = vst [vmem:[%s513] ss:$9 sm:$0xff] %v439
  %571 = vst [vmem:[%s515] ss:$9 sm:$0xff] %v440
  %572 = vst [vmem:[%s517] ss:$9 sm:$0xff] %v441
  %v573 = vld [vmem:[#allocation1] sm:$0xff]
  %574 = vst [vmem:[#allocation1] ss:$9 sm:$0xff] %v355
  %v575 = vld [vmem:[#allocation1] sm:$0xff]
  %vm583 = vcmask 465920
  %v585 = vsel %vm583, %v492, 0
  %v588 = vsel %vm583, %v493, 0
  %v591 = vsel %vm583, %v494, 0
  %v594 = vsel %vm583, %v495, 0
  %v597 = vsel %vm583, %v496, 0
  %v600 = vsel %vm583, %v497, 0
  %v603 = vsel %vm583, %v498, 0
  %v606 = vsel %vm583, %v499, 0
  %vm608 = vcmask 1040384
  %v609 = vsel %vm608, %v575, 0
  %611 = vmatpush.msra.mxu0 0.0
  %612 = vmatpush.msra.mxu0 0.0
  %613 = vmatpush.msra.mxu0 0.0
  %614 = vmatpush.msra.mxu0 0.0
  %615 = vmatpush.msra.mxu0 0.0
  %616 = vmatpush.msra.mxu0 0.0
  %617 = vmatpush.msra.mxu0 0.0
  %618 = vmatpush.msra.mxu0 0.0
  %619 = vmatpush.msra.mxu0 %v609
  %620 = vmatpush.msra.mxu0 %v573
  %621 = vmatpush.msra.mxu0 %v564
  %622 = vmatpush.msra.mxu0 %v555
  %623 = vmatpush.msra.mxu0 %v546
  %624 = vmatpush.msra.mxu0 %v537
  %625 = vmatpush.msra.mxu0 %v528
  %626 = vmatpush.msra.mxu0 %v519
  %627 = vmatmul.f32.gmra.mxu0 %v585
  %v628 = vpop.f32.mrf.mxu0
  %v629 = vadd.f32 %v502, %v628
  %630 = vmatmul.f32.gmra.mxu0 %v588
  %v631 = vpop.f32.mrf.mxu0
  %v632 = vadd.f32 %v502, %v631
  %633 = vmatmul.f32.gmra.mxu0 %v591
  %v634 = vpop.f32.mrf.mxu0
  %v635 = vadd.f32 %v502, %v634
  %636 = vmatmul.f32.gmra.mxu0 %v594
  %v637 = vpop.f32.mrf.mxu0
  %v638 = vadd.f32 %v502, %v637
  %639 = vmatmul.f32.gmra.mxu0 %v597
  %v640 = vpop.f32.mrf.mxu0
  %v641 = vadd.f32 %v502, %v640
  %642 = vmatmul.f32.gmra.mxu0 %v600
  %v643 = vpop.f32.mrf.mxu0
  %v644 = vadd.f32 %v502, %v643
  %645 = vmatmul.f32.gmra.mxu0 %v603
  %v646 = vpop.f32.mrf.mxu0
  %v647 = vadd.f32 %v502, %v646
  %648 = vmatmul.f32.gmra.mxu0 %v606
  %v649 = vpop.f32.mrf.mxu0
  %v650 = vadd.f32 %v502, %v649
  %651 = vdwg.mxu0
  %vm652 = vcmask 261120
  %653 = vst.msk [vmem:[%s4] sm:$0xff] %vm652, %v629
  %654 = vst.msk [vmem:[%s4 + $0x8] sm:$0xff] %vm652, %v632
  %655 = vst.msk [vmem:[%s4 + $0x10] sm:$0xff] %vm652, %v635
  %656 = vst.msk [vmem:[%s4 + $0x18] sm:$0xff] %vm652, %v638
  %657 = vst.msk [vmem:[%s4 + $0x20] sm:$0xff] %vm652, %v641
  %658 = vst.msk [vmem:[%s4 + $0x28] sm:$0xff] %vm652, %v644
  %659 = vst.msk [vmem:[%s4 + $0x30] sm:$0xff] %vm652, %v647
  %vm660 = vcmask 253952
  %661 = vst.msk [vmem:[%s4 + $0x38] sm:$0x1] %vm660, %v650
  %662 = vst [vmem:[#allocation1] ss:$9 sm:$0xff] %v442
  %s663 = scalar_lea.vmem [#allocation1], 1
  %664 = vst [vmem:[%s663] ss:$9 sm:$0xff] %v443
  %s665 = scalar_lea.vmem [#allocation1], 2
  %666 = vst [vmem:[%s665] ss:$9 sm:$0xff] %v444
  %s667 = scalar_lea.vmem [#allocation1], 3
  %668 = vst [vmem:[%s667] ss:$9 sm:$0xff] %v445
  %s669 = scalar_lea.vmem [#allocation1], 4
  %670 = vst [vmem:[%s669] ss:$9 sm:$0xff] %v446
  %s671 = scalar_lea.vmem [#allocation1], 5
  %672 = vst [vmem:[%s671] ss:$9 sm:$0xff] %v447
  %s673 = scalar_lea.vmem [#allocation1], 6
  %674 = vst [vmem:[%s673] ss:$9 sm:$0xff] %v448
  %s675 = scalar_lea.vmem [#allocation1], 7
  %676 = vst [vmem:[%s675] ss:$9 sm:$0xff] %v358
  %v677 = vld [vmem:[#allocation1] sm:$0xff]
  %678 = vst [vmem:[#allocation1] ss:$9 sm:$0xff] %v449
  %679 = vst [vmem:[%s663] ss:$9 sm:$0xff] %v450
  %680 = vst [vmem:[%s665] ss:$9 sm:$0xff] %v451
  %681 = vst [vmem:[%s667] ss:$9 sm:$0xff] %v452
  %682 = vst [vmem:[%s669] ss:$9 sm:$0xff] %v453
  %683 = vst [vmem:[%s671] ss:$9 sm:$0xff] %v454
  %684 = vst [vmem:[%s673] ss:$9 sm:$0xff] %v455
  %685 = vst [vmem:[%s675] ss:$9 sm:$0xff] %v361
  %v686 = vld [vmem:[#allocation1] sm:$0xff]
  %687 = vst [vmem:[#allocation1] ss:$9 sm:$0xff] %v456
  %688 = vst [vmem:[%s663] ss:$9 sm:$0xff] %v457
  %689 = vst [vmem:[%s665] ss:$9 sm:$0xff] %v458
  %690 = vst [vmem:[%s667] ss:$9 sm:$0xff] %v459
  %691 = vst [vmem:[%s669] ss:$9 sm:$0xff] %v460
  %692 = vst [vmem:[%s671] ss:$9 sm:$0xff] %v461
  %693 = vst [vmem:[%s673] ss:$9 sm:$0xff] %v462
  %694 = vst [vmem:[%s675] ss:$9 sm:$0xff] %v364
  %v695 = vld [vmem:[#allocation1] sm:$0xff]
  %696 = vst [vmem:[#allocation1] ss:$9 sm:$0xff] %v463
  %697 = vst [vmem:[%s663] ss:$9 sm:$0xff] %v464
  %698 = vst [vmem:[%s665] ss:$9 sm:$0xff] %v465
  %699 = vst [vmem:[%s667] ss:$9 sm:$0xff] %v466
  %700 = vst [vmem:[%s669] ss:$9 sm:$0xff] %v467
  %701 = vst [vmem:[%s671] ss:$9 sm:$0xff] %v468
  %702 = vst [vmem:[%s673] ss:$9 sm:$0xff] %v469
  %703 = vst [vmem:[%s675] ss:$9 sm:$0xff] %v367
  %v704 = vld [vmem:[#allocation1] sm:$0xff]
  %705 = vst [vmem:[#allocation1] ss:$9 sm:$0xff] %v470
  %706 = vst [vmem:[%s663] ss:$9 sm:$0xff] %v471
  %707 = vst [vmem:[%s665] ss:$9 sm:$0xff] %v472
  %708 = vst [vmem:[%s667] ss:$9 sm:$0xff] %v473
  %709 = vst [vmem:[%s669] ss:$9 sm:$0xff] %v474
  %710 = vst [vmem:[%s671] ss:$9 sm:$0xff] %v475
  %711 = vst [vmem:[%s673] ss:$9 sm:$0xff] %v476
  %712 = vst [vmem:[%s675] ss:$9 sm:$0xff] %v370
  %v713 = vld [vmem:[#allocation1] sm:$0xff]
  %714 = vst [vmem:[#allocation1] ss:$9 sm:$0xff] %v477
  %715 = vst [vmem:[%s663] ss:$9 sm:$0xff] %v478
  %716 = vst [vmem:[%s665] ss:$9 sm:$0xff] %v479
  %717 = vst [vmem:[%s667] ss:$9 sm:$0xff] %v480
  %718 = vst [vmem:[%s669] ss:$9 sm:$0xff] %v481
  %719 = vst [vmem:[%s671] ss:$9 sm:$0xff] %v482
  %720 = vst [vmem:[%s673] ss:$9 sm:$0xff] %v483
  %721 = vst [vmem:[%s675] ss:$9 sm:$0xff] %v373
  %v722 = vld [vmem:[#allocation1] sm:$0xff]
  %723 = vst [vmem:[#allocation1] ss:$9 sm:$0xff] %v484
  %724 = vst [vmem:[%s663] ss:$9 sm:$0xff] %v485
  %725 = vst [vmem:[%s665] ss:$9 sm:$0xff] %v486
  %726 = vst [vmem:[%s667] ss:$9 sm:$0xff] %v487
  %727 = vst [vmem:[%s669] ss:$9 sm:$0xff] %v488
  %728 = vst [vmem:[%s671] ss:$9 sm:$0xff] %v489
  %729 = vst [vmem:[%s673] ss:$9 sm:$0xff] %v490
  %730 = vst [vmem:[%s675] ss:$9 sm:$0xff] %v376
  %v731 = vld [vmem:[#allocation1] sm:$0xff]
  %732 = vst [vmem:[#allocation1] ss:$9 sm:$0xff] %v491
  %v733 = vld [vmem:[#allocation1] sm:$0xff]
  %v741 = vsel %vm608, %v733, 0
  %743 = vmatpush.msra.mxu0 0.0
  %744 = vmatpush.msra.mxu0 0.0
  %745 = vmatpush.msra.mxu0 0.0
  %746 = vmatpush.msra.mxu0 0.0
  %747 = vmatpush.msra.mxu0 0.0
  %748 = vmatpush.msra.mxu0 0.0
  %749 = vmatpush.msra.mxu0 0.0
  %750 = vmatpush.msra.mxu0 0.0
  %751 = vmatpush.msra.mxu0 %v741
  %752 = vmatpush.msra.mxu0 %v731
  %753 = vmatpush.msra.mxu0 %v722
  %754 = vmatpush.msra.mxu0 %v713
  %755 = vmatpush.msra.mxu0 %v704
  %756 = vmatpush.msra.mxu0 %v695
  %757 = vmatpush.msra.mxu0 %v686
  %758 = vmatpush.msra.mxu0 %v677
  %759 = vmatmul.f32.gmra.mxu0 %v585
  %v760 = vpop.f32.mrf.mxu0
  %v761 = vadd.f32 %v502, %v760
  %762 = vmatmul.f32.gmra.mxu0 %v588
  %v763 = vpop.f32.mrf.mxu0
  %v764 = vadd.f32 %v502, %v763
  %765 = vmatmul.f32.gmra.mxu0 %v591
  %v766 = vpop.f32.mrf.mxu0
  %v767 = vadd.f32 %v502, %v766
  %768 = vmatmul.f32.gmra.mxu0 %v594
  %v769 = vpop.f32.mrf.mxu0
  %v770 = vadd.f32 %v502, %v769
  %771 = vmatmul.f32.gmra.mxu0 %v597
  %v772 = vpop.f32.mrf.mxu0
  %v773 = vadd.f32 %v502, %v772
  %774 = vmatmul.f32.gmra.mxu0 %v600
  %v775 = vpop.f32.mrf.mxu0
  %v776 = vadd.f32 %v502, %v775
  %777 = vmatmul.f32.gmra.mxu0 %v603
  %v778 = vpop.f32.mrf.mxu0
  %v779 = vadd.f32 %v502, %v778
  %780 = vmatmul.f32.gmra.mxu0 %v606
  %v781 = vpop.f32.mrf.mxu0
  %v782 = vadd.f32 %v502, %v781
  %783 = vdwg.mxu0
  %s784 = scalar_lea.vmem %s4, 64
  %785 = vst.msk [vmem:[%s784] sm:$0xff] %vm652, %v761
  %786 = vst.msk [vmem:[%s784 + $0x8] sm:$0xff] %vm652, %v764
  %787 = vst.msk [vmem:[%s784 + $0x10] sm:$0xff] %vm652, %v767
  %788 = vst.msk [vmem:[%s784 + $0x18] sm:$0xff] %vm652, %v770
  %789 = vst.msk [vmem:[%s784 + $0x20] sm:$0xff] %vm652, %v773
  %790 = vst.msk [vmem:[%s784 + $0x28] sm:$0xff] %vm652, %v776
  %791 = vst.msk [vmem:[%s784 + $0x30] sm:$0xff] %vm652, %v779
  %792 = vst.msk [vmem:[%s784 + $0x38] sm:$0x1] %vm660, %v782
  // Predicated region
  $region18: #{tpu_custom_call.1} parent=0 // pred_check
    _
  $region19: #{tpu_custom_call.1} parent=0 // pred_check_branch
    %794 = sbr.rel (0) target = $region21
  $region20: #{tpu_custom_call.1} parent=0 // pred_region
    _
  $region21: #{tpu_custom_call.1} parent=0 // pred_fallthru
    _
  // Predicated region
  $region22: #{tpu_custom_call.1} parent=0 // pred_check
    _
  $region23: #{tpu_custom_call.1} parent=0 // pred_check_branch
    %796 = sbr.rel (0) target = $region25
  $region24: #{tpu_custom_call.1} parent=0 // pred_region
    _
  $region25: #{tpu_custom_call.1} parent=0 // pred_fallthru
    _

</llo_original>
